<compile_context>
chip_gen: v7x
topology: tpu7x:2x2x1
jax: 0.10.0
libtpu: 0.0.40
codegen_flags: <defaults>
</compile_context>

<pallas_src>
import jax
import jax.numpy as jnp
from jax.experimental import pallas as pl
from jax.experimental.pallas import tpu as pltpu

_LANE = 128
_MAX_BLOCK_ROWS = 512  # 512 rows x <=1024 lanes x 4 B x double buffers << VMEM limit


def _tile_layout(n, max_block_rows=_MAX_BLOCK_ROWS):
    """Pick a lane-dense (rows, lanes) layout and row-block size for n elements."""
    lanes = 4 * _LANE  # fallback (requires padding) when n has no 128-multiple divisor
    for cand in (8 * _LANE, 4 * _LANE, 2 * _LANE, _LANE):
        if n % cand == 0:
            lanes = cand
            break
    rows = pl.cdiv(n, lanes)
    tb = min(max_block_rows, rows)
    rows_p = pl.cdiv(rows, tb) * tb  # pad rows so the grid divides evenly
    return lanes, rows_p, tb


def _to_2d(arr, lanes, rows_p):
    flat = arr.reshape(-1)
    padded = rows_p * lanes
    if padded != flat.size:
        flat = jnp.pad(flat, (0, padded - flat.size))
    return flat.reshape(rows_p, lanes)


def _residual_add_kernel(x_ref, y_ref, o_ref):
    o_ref[...] = x_ref[...] + y_ref[...]


def residual_add(x, y):
    """Pallas elementwise x + y (the Residual add) for arbitrary same-shape arrays."""
    assert x.shape == y.shape, (x.shape, y.shape)
    dt = jnp.result_type(x.dtype, y.dtype)
    n = x.size
    lanes, rows_p, tb = _tile_layout(n)
    x2 = _to_2d(x.astype(dt), lanes, rows_p)
    y2 = _to_2d(y.astype(dt), lanes, rows_p)
    out2 = pl.pallas_call(
        _residual_add_kernel,
        out_shape=jax.ShapeDtypeStruct((rows_p, lanes), dt),
        grid=(rows_p // tb,),
        in_specs=[pl.BlockSpec((tb, lanes), lambda i: (i, 0)),
                  pl.BlockSpec((tb, lanes), lambda i: (i, 0))],
        out_specs=pl.BlockSpec((tb, lanes), lambda i: (i, 0)),
        compiler_params=pltpu.CompilerParams(
            dimension_semantics=("parallel",)),
    )(x2, y2)
    return out2.reshape(-1)[:n].reshape(x.shape)


def fused_residual(fn, x):
    """x + fn(x) with fn applied per VMEM tile inside a single kernel.

    Only valid when fn is elementwise / block-local.  Padding lanes are
    sliced away afterwards, so fn(0) != 0 is harmless."""
    n = x.size
    lanes, rows_p, tb = _tile_layout(n)
    x2 = _to_2d(x, lanes, rows_p)

    def kernel(x_ref, o_ref):
        xv = x_ref[...]
        o_ref[...] = xv + fn(xv)

    out2 = pl.pallas_call(
        kernel,
        out_shape=jax.ShapeDtypeStruct((rows_p, lanes), x.dtype),
        grid=(rows_p // tb,),
        in_specs=[pl.BlockSpec((tb, lanes), lambda i: (i, 0))],
        out_specs=pl.BlockSpec((tb, lanes), lambda i: (i, 0)),
        compiler_params=pltpu.CompilerParams(
            dimension_semantics=("parallel",)),
    )(x2)
    return out2.reshape(-1)[:n].reshape(x.shape)


class Residual:
    """JAX/Pallas port of the PyTorch `Residual` module: __call__(x, ...) = x + fn(x, ...)."""

    def __init__(self, fn, *, elementwise=False):
        self.fn = fn
        self.elementwise = elementwise

    def __call__(self, x, *args, **kwargs):
        if self.elementwise and not args and not kwargs:
            return fused_residual(self.fn, x)
        # TODO(synk): arbitrary fn (attention / norm in DDPM) has no generic
        # Pallas lowering; it runs as plain JAX and only the residual add is
        # a Pallas kernel.
        y = self.fn(x, *args, **kwargs)
        return residual_add(x, y)


if __name__ == "__main__":
    key = jax.random.PRNGKey(0)
    k1, k2 = jax.random.split(key)

    batch, channels, spatial = 2, 4, 16
    x = jax.random.normal(k1, (batch, channels, spatial, spatial), jnp.float32)

    # 1) Elementwise fn -> fully fused single-kernel path.
    res_fused = Residual(jax.nn.silu, elementwise=True)
    out1 = jax.block_until_ready(res_fused(x))
    ref1 = x + jax.nn.silu(x)
    assert out1.shape == x.shape and out1.dtype == x.dtype
    assert jnp.allclose(out1, ref1, atol=1e-6, rtol=1e-6)

    # 2) Arbitrary fn with extra args (channel-mixing matmul) -> fn in plain
    #    JAX, residual add in Pallas.
    w = jax.random.normal(k2, (channels, channels), jnp.float32) * 0.1
    mix = lambda t, wgt: jnp.einsum("bchw,cd->bdhw", t, wgt)
    res_general = Residual(mix)
    out2 = jax.block_until_ready(res_general(x, w))
    ref2 = x + mix(x, w)
    assert out2.shape == x.shape
    assert jnp.allclose(out2, ref2, atol=1e-5, rtol=1e-5)

    print("KERNEL_OK")
</pallas_src>

<mosaic_0001>
module attributes {stable_mosaic.version = 11 : i64} {
  func.func @kernel(%arg0: i32, %arg1: memref<2x1024xf32, #tpu.memory_space<vmem>>, %arg2: memref<2x1024xf32, #tpu.memory_space<vmem>>) attributes {dimension_semantics = [#tpu.dimension_semantics<parallel>], iteration_bounds = array<i64: 1>, scalar_prefetch = 0 : i64, scratch_operands = 0 : i64, tpu.core_type = #tpu.core_type<tc>, window_params = [{transform_indices = @transform_0, window_bounds = array<i64: 2, 1024>}, {transform_indices = @transform_1, window_bounds = array<i64: 2, 1024>}]} {
    %c0 = arith.constant 0 : index
    %c0_0 = arith.constant 0 : index
    %0 = vector.load %arg1[%c0, %c0_0] : memref<2x1024xf32, #tpu.memory_space<vmem>>, vector<2x1024xf32>
    %1 = arith.negf %0 : vector<2x1024xf32>
    %2 = math.exp %1 : vector<2x1024xf32>
    %cst = arith.constant 1.000000e+00 : f32
    %3 = vector.broadcast %cst : f32 to vector<2x1024xf32>
    %4 = arith.addf %3, %2 : vector<2x1024xf32>
    %5 = arith.divf %3, %4 : vector<2x1024xf32>
    %6 = arith.mulf %0, %5 : vector<2x1024xf32>
    %7 = arith.addf %0, %6 : vector<2x1024xf32>
    %c0_1 = arith.constant 0 : index
    %c0_2 = arith.constant 0 : index
    %8 = vector.load %arg2[%c0_1, %c0_2] : memref<2x1024xf32, #tpu.memory_space<vmem>>, vector<2x1024xf32>
    tpu.vector_store %arg2[%c0_1, %c0_2], %7 {strides = array<i32>} : memref<2x1024xf32, #tpu.memory_space<vmem>>, vector<2x1024xf32>,
    return
  }
  func.func @transform_0(%arg0: i32) -> (i32, i32) {
    %c0_i32 = arith.constant 0 : i32
    %c0_i32_0 = arith.constant 0 : i32
    return %arg0, %c0_i32 : i32, i32
  }
  func.func @transform_1(%arg0: i32) -> (i32, i32) {
    %c0_i32 = arith.constant 0 : i32
    %c0_i32_0 = arith.constant 0 : i32
    return %arg0, %c0_i32 : i32, i32
  }
}

</mosaic_0001>

<llo_original>
// kernel: tpu_custom_call.1
$region0: #{tpu_custom_call.1}
  #allocation0 [shape = 'u32[]', space=smem, size = 0x4, offset = 0x4, fixed_abs, tag = 'smem constant byte address 0x4 - core index']
  #allocation1 [shape = 'u32[144,128]{1,0:T(1,128)}', space=vmem, size = 0x12000, scoped, tag = 'internal scratch']
  %s0 = inlined_call_operand.hbm [shape: f32[2,1024], index: 0, kind: input, shape index: {}]
  %s1 = inlined_call_operand.hbm [shape: f32[2,1024], index: 1, kind: output, shape index: {}]
  %s2 = sld [smem:[#allocation0]]
  $region18: #{tpu_custom_call.1} parent=0
    _
  %s4 = ssub.s32 1, %s2
  %s5 = scalar_select 0, %s4, %s2
  $region1: #{tpu_custom_call.1} parent=0
    #allocation2 [shape = 'u8[8192]{0}', space=vmem, size = 0x2000, scoped, tag = 'input window, operand 0, single buffered']
    #allocation3 [shape = 's32[1]{0}', space=sflag, size = 0x4, scoped, tag = 'scoped memory for tpu_custom_call.1']
    #allocation4 [shape = 's32[1]{0}', space=sflag, size = 0x4, scoped, tag = 'scoped memory for tpu_custom_call.1']
    #allocation5 [shape = 'u8[8192]{0}', space=vmem, size = 0x2000, scoped, tag = 'output window, operand 0, single buffered']
    %6 = vsyncpa [#allocation3], 0
    %7 = vsyncpa [#allocation4], 0
    // Predicated region
    $region2: #{tpu_custom_call.1} parent=1 // pred_check
      _
    $region3: #{tpu_custom_call.1} parent=1 // pred_check_branch
      %9 = sbr.rel (0) target = $region5
    $region4: #{tpu_custom_call.1} parent=1 // pred_region
      %s11 = ssub.s32 256, 256
      %12 = vsyncadd [#allocation3], %s11
      %s14 = sshll.u32 [#allocation2], 4
      %s15 = int_to_ptr.vmem [resolvable:$true] %s14
      %17 = dma.hbm_to_vmem [thread:$0]  %s0, 256, %s15, [#allocation3]
    $region5: #{tpu_custom_call.1} parent=1 // pred_fallthru
      _
    // Predicated region
    $region6: #{tpu_custom_call.1} parent=1 // pred_check
      _
    $region7: #{tpu_custom_call.1} parent=1 // pred_check_branch
      %19 = sbr.rel (0) target = $region9
    $region8: #{tpu_custom_call.1} parent=1 // pred_region
      %20 = dma.done [#allocation3], 256
    $region9: #{tpu_custom_call.1} parent=1 // pred_fallthru
      _
    %v21 = vld [vmem:[#allocation2] sm:$0xff]
    %v22 = vld [vmem:[#allocation2 + $0x8] sm:$0xff]
    %v23 = vxor.u32 %v21, 2147483648
    %v24 = vxor.u32 %v22, 2147483648
    %v25 = vmul.f32 %v23, 1.442695
    %v26 = vpow.pop %v25
    %v27 = vmul.f32 %v24, 1.442695
    %v28 = vpow.pop %v27
    %v29 = vadd.f32 %v26, 1.0
    %v30 = vadd.f32 %v28, 1.0
    %v31 = vrcp.pop %v29
    %v32 = vmul.f32 1.0, %v31
    %v33 = vrcp.pop %v30
    %v34 = vmul.f32 1.0, %v33
    %v35 = vmul.f32 %v21, %v32
    %v36 = vmul.f32 %v22, %v34
    %v37 = vadd.f32 %v21, %v35
    %v38 = vadd.f32 %v22, %v36
    %39 = vst [vmem:[#allocation5] sm:$0xff] %v37
    %40 = vst [vmem:[#allocation5 + $0x8] sm:$0xff] %v38
    // Predicated region
    $region10: #{tpu_custom_call.1} parent=1 // pred_check
      _
    $region11: #{tpu_custom_call.1} parent=1 // pred_check_branch
      %42 = sbr.rel (0) target = $region13
    $region12: #{tpu_custom_call.1} parent=1 // pred_region
      %s44 = ssub.s32 256, 256
      %45 = vsyncadd [#allocation4], %s44
      %s47 = sshll.u32 [#allocation5], 4
      %s48 = int_to_ptr.vmem [resolvable:$true] %s47
      %50 = dma.vmem_to_hbm [thread:$0]  %s48, 256, %s1, [#allocation4]
    $region13: #{tpu_custom_call.1} parent=1 // pred_fallthru
      _
    // Predicated region
    $region14: #{tpu_custom_call.1} parent=1 // pred_check
      _
    $region15: #{tpu_custom_call.1} parent=1 // pred_check_branch
      %52 = sbr.rel (0) target = $region17
    $region16: #{tpu_custom_call.1} parent=1 // pred_region
      %53 = dma.done [#allocation4], 256
    $region17: #{tpu_custom_call.1} parent=1 // pred_fallthru
      _
    %54 = vsyncpa [#allocation3], 1
    %55 = vsyncpa [#allocation4], 1

</llo_original>
